<compile_context>
chip_gen: v7x
topology: tpu7x:2x2x1
jax: 0.10.0
libtpu: 0.0.40
codegen_flags: <defaults>
</compile_context>

<pallas_src>
import functools
import math

import jax
import jax.numpy as jnp
from jax.experimental import pallas as pl
from jax.experimental.pallas import tpu as pltpu


# ----------------------------- hardware-aware sizing --------------------------------

def _vmem_budget():
    """Return (physical VMEM capacity, vmem_limit_bytes to request)."""
    cap = 64 * 1024 * 1024
    try:
        info = pltpu.get_tpu_info()
        cap = int(getattr(info, "vmem_capacity_bytes", cap))
    except Exception:
        pass
    # 48 MiB on 64 MiB parts (v7x), 64 MiB on 128 MiB parts (v5e/v6e).
    limit = min(max(cap // 2, 48 << 20), max(cap - (16 << 20), 32 << 20))
    return cap, limit


def _pick_spatial_tile(hw, c, itemsize, target_bytes):
    """Spatial (lane) tile: whole image if small, else a multiple of 128 near target."""
    if hw * c * itemsize <= target_bytes:
        return hw                      # full-dim block is always legal
    if hw < 128:
        return hw                      # must use the full (tiny) spatial dim
    cap = max(128, (target_bytes // (c * itemsize)) // 128 * 128)
    max_ts = (hw // 128) * 128
    return int(min(cap, max_ts))


# --------------- Fused kernel: pool + excite MLP + channel scale (small HW) ----------

def _fused_kernel(x_ref, w1_ref, b1_ref, w2_ref, b2_ref, o_ref, *, inv_hw):
    x = x_ref[0].astype(jnp.float32)                                   # (C, HW)
    mean = jnp.sum(x, axis=-1, keepdims=True) * inv_hw                 # (C, 1)
    # 1x1 conv on a (C,1,1) tensor == matmul with the (Csq, C) weight.
    y1 = jnp.dot(w1_ref[...].astype(jnp.float32), mean,
                 preferred_element_type=jnp.float32)
    y1 = jnp.maximum(y1 + b1_ref[...].astype(jnp.float32), 0.0)        # ReLU
    y2 = jnp.dot(w2_ref[...].astype(jnp.float32), y1,
                 preferred_element_type=jnp.float32)
    scale = jax.nn.sigmoid(y2 + b2_ref[...].astype(jnp.float32))       # (C, 1)
    o_ref[0] = (x * scale).astype(o_ref.dtype)


# --------------- Pass 1 (large HW): partial spatial sums, megacore-split -------------

def _pool_kernel(x_ref, psum_ref, *, hw, ts, ns_chunk, need_mask):
    s = pl.program_id(2)

    @pl.when(s == 0)
    def _():
        psum_ref[...] = jnp.zeros_like(psum_ref)

    x = x_ref[0].astype(jnp.float32)                                   # (C, ts)
    if need_mask:
        # Zero out the ragged tail of the last real tile and any overrun tiles.
        t = pl.program_id(1) * ns_chunk + s                            # global tile idx
        lane = jax.lax.broadcasted_iota(jnp.int32, x.shape, 1)
        rem = hw - t * ts
        x = jnp.where(lane < rem, x, 0.0)
    psum_ref[...] += jnp.sum(x, axis=-1, keepdims=True)[None, None]    # (1,1,C,1)


# --------------- Pass 2 (large HW): broadcast per-(B, C) channel scale ---------------

def _scale_kernel(x_ref, scale_ref, o_ref):
    # x_ref: (1, C, ts), scale_ref: (1, C, 1) -> broadcast over lanes.
    o_ref[0] = (x_ref[0].astype(jnp.float32)
                * scale_ref[0].astype(jnp.float32)).astype(o_ref.dtype)


# ------------------------------------ wrapper ---------------------------------------

def channel_attention_forward(x, params, *, spatial_tile=None, force_two_pass=False):
    """x: (B, C, H, W) NCHW (same layout as the PyTorch module)."""
    B, C, H, W = x.shape
    HW = H * W
    Csq = params["w1"].shape[0]
    itemsize = jnp.dtype(x.dtype).itemsize

    cap, vmem_limit = _vmem_budget()
    x_flat = x.reshape(B, C, HW)              # free: no transpose, spatial -> lanes

    w1 = params["w1"].astype(jnp.float32)     # (Csq, C)  torch conv weight squeezed
    b1 = params["b1"].astype(jnp.float32)     # (Csq,)
    w2 = params["w2"].astype(jnp.float32)     # (C, Csq)
    b2 = params["b2"].astype(jnp.float32)     # (C,)

    x_bytes = B * C * HW * itemsize
    block_bytes = C * HW * itemsize
    # in+out double buffers + in-kernel f32 temps + margin.
    fused_need = 4 * block_bytes + 2 * C * HW * 4 + (2 << 20)

    if not force_two_pass and fused_need <= vmem_limit:
        # -------- single fused pass: 1 read + 1 write of x --------
        cost = pl.CostEstimate(
            flops=int(B * (2 * C * HW + 4 * C * Csq)),
            transcendentals=int(B * C),
            bytes_accessed=int(2 * x_bytes + (2 * C * Csq + C + Csq) * 4),
        )
        out = pl.pallas_call(
            functools.partial(_fused_kernel, inv_hw=1.0 / HW),
            out_shape=jax.ShapeDtypeStruct((B, C, HW), x.dtype),
            grid=(B,),
            in_specs=[
                pl.BlockSpec((1, C, HW), lambda b: (b, 0, 0)),
                pl.BlockSpec((Csq, C), lambda b: (0, 0)),
                pl.BlockSpec((Csq, 1), lambda b: (0, 0)),
                pl.BlockSpec((C, Csq), lambda b: (0, 0)),
                pl.BlockSpec((C, 1), lambda b: (0, 0)),
            ],
            out_specs=pl.BlockSpec((1, C, HW), lambda b: (b, 0, 0)),
            compiler_params=pltpu.CompilerParams(
                dimension_semantics=("parallel",),
                vmem_limit_bytes=vmem_limit,
            ),
            cost_estimate=cost,
        )(x_flat, w1, b1.reshape(Csq, 1), w2, b2.reshape(C, 1))
        return out.reshape(B, C, H, W)

    # ------------- two-pass fallback for images that do not fit one VMEM block -------
    target_tile = (8 << 20) if cap >= (96 << 20) else (6 << 20)
    ts = spatial_tile if spatial_tile is not None else _pick_spatial_tile(
        HW, C, itemsize, target_tile)
    ns_total = pl.cdiv(HW, ts)
    nsplit = 2 if ns_total >= 2 else 1                # second TC works even when B == 1
    ns_chunk = pl.cdiv(ns_total, nsplit)
    need_mask = (nsplit * ns_chunk * ts) != HW

    if nsplit * ns_chunk == ns_total:
        x_pool_map = lambda b, p, s: (b, 0, p * ns_chunk + s)
    else:
        # Overrun tiles (beyond ns_total-1) are clamped; their contribution is masked.
        x_pool_map = lambda b, p, s: (b, 0, jnp.minimum(p * ns_chunk + s, ns_total - 1))

    pool_cost = pl.CostEstimate(
        flops=int(B * C * HW), transcendentals=0,
        bytes_accessed=int(x_bytes + B * nsplit * C * 4))
    psum = pl.pallas_call(
        functools.partial(_pool_kernel, hw=HW, ts=ts, ns_chunk=ns_chunk,
                          need_mask=need_mask),
        out_shape=jax.ShapeDtypeStruct((B, nsplit, C, 1), jnp.float32),
        grid=(B, nsplit, ns_chunk),
        in_specs=[pl.BlockSpec((1, C, ts), x_pool_map)],
        out_specs=pl.BlockSpec((1, 1, C, 1), lambda b, p, s: (b, p, 0, 0)),
        compiler_params=pltpu.CompilerParams(
            dimension_semantics=("parallel", "parallel", "arbitrary"),
            vmem_limit_bytes=vmem_limit,
        ),
        cost_estimate=pool_cost,
    )(x_flat)

    # Tiny squeeze/excite MLP on the (B, C) means: negligible work, plain JAX.
    mean = psum[..., 0].sum(axis=1) * (1.0 / HW)                       # (B, C) f32
    y1 = jnp.maximum(mean @ w1.T + b1, 0.0)                            # (B, Csq)
    scale = jax.nn.sigmoid(y1 @ w2.T + b2).reshape(B, C, 1)            # (B, C, 1) f32

    scale_cost = pl.CostEstimate(
        flops=int(B * C * HW), transcendentals=0,
        bytes_accessed=int(2 * x_bytes + B * C * 4))
    out = pl.pallas_call(
        _scale_kernel,
        out_shape=jax.ShapeDtypeStruct((B, C, HW), x.dtype),
        grid=(B, ns_total),
        in_specs=[
            pl.BlockSpec((1, C, ts), lambda b, s: (b, 0, s)),
            pl.BlockSpec((1, C, 1), lambda b, s: (b, 0, 0)),
        ],
        out_specs=pl.BlockSpec((1, C, ts), lambda b, s: (b, 0, s)),
        compiler_params=pltpu.CompilerParams(
            dimension_semantics=("parallel", "parallel"),
            vmem_limit_bytes=vmem_limit,
        ),
        cost_estimate=scale_cost,
    )(x_flat, scale)

    return out.reshape(B, C, H, W)


# ---------------------------------- params / reference ------------------------------

def init_params(key, num_feat, squeeze_factor=16):
    csq = num_feat // squeeze_factor
    k1, k2, k3, k4 = jax.random.split(key, 4)
    s1 = 1.0 / math.sqrt(num_feat)    # Conv2d(num_feat -> csq, 1x1): fan_in = num_feat
    s2 = 1.0 / math.sqrt(csq)         # Conv2d(csq -> num_feat, 1x1): fan_in = csq
    return {
        # torch weight (csq, num_feat, 1, 1) -> stored squeezed (csq, num_feat)
        "w1": jax.random.uniform(k1, (csq, num_feat), jnp.float32, -s1, s1),
        "b1": jax.random.uniform(k2, (csq,), jnp.float32, -s1, s1),
        # torch weight (num_feat, csq, 1, 1) -> stored squeezed (num_feat, csq)
        "w2": jax.random.uniform(k3, (num_feat, csq), jnp.float32, -s2, s2),
        "b2": jax.random.uniform(k4, (num_feat,), jnp.float32, -s2, s2),
    }


def _reference(x, params):
    """Pure-JAX replica of the PyTorch forward."""
    mean = jnp.mean(x.astype(jnp.float32), axis=(2, 3))                # (B, C)
    y1 = jax.nn.relu(mean @ params["w1"].T + params["b1"])             # (B, Csq)
    y2 = jax.nn.sigmoid(y1 @ params["w2"].T + params["b2"])            # (B, C)
    return (x.astype(jnp.float32) * y2[:, :, None, None]).astype(x.dtype)


if __name__ == "__main__":
    key = jax.random.PRNGKey(0)
    k1, k2, k3, k4 = jax.random.split(key, 4)

    # Case 1: small image -> fused single-pass kernel (1 read + 1 write of x).
    B, C, H, W = 2, 64, 16, 16
    x = jax.random.normal(k1, (B, C, H, W), jnp.float32)
    params = init_params(k2, C, squeeze_factor=16)
    out = jax.block_until_ready(channel_attention_forward(x, params))
    ref = _reference(x, params)
    assert out.shape == (B, C, H, W)
    assert bool(jnp.all(jnp.isfinite(out)))
    assert bool(jnp.allclose(out, ref, atol=1e-5, rtol=1e-5))

    # Case 2: force the streaming two-pass path (megacore-split reduction, masked
    # ragged/overrun tiles, cdiv grid) on a non-128-divisible spatial size.
    B2, C2, H2, W2 = 1, 64, 18, 18                     # HW = 324 -> 3 ragged tiles of 128
    x2 = jax.random.normal(k3, (B2, C2, H2, W2), jnp.float32)
    params2 = init_params(k4, C2, squeeze_factor=16)
    out2 = jax.block_until_ready(
        channel_attention_forward(x2, params2, spatial_tile=128, force_two_pass=True))
    ref2 = _reference(x2, params2)
    assert out2.shape == (B2, C2, H2, W2)
    assert bool(jnp.all(jnp.isfinite(out2)))
    assert bool(jnp.allclose(out2, ref2, atol=1e-5, rtol=1e-5))

    print("KERNEL_OK")
</pallas_src>

<mosaic_0001>
module attributes {stable_mosaic.version = 11 : i64} {
  func.func @_fused_kernel(%arg0: i32, %arg1: memref<1x64x256xf32, #tpu.memory_space<vmem>>, %arg2: memref<4x64xf32, #tpu.memory_space<vmem>>, %arg3: memref<4x1xf32, #tpu.memory_space<vmem>>, %arg4: memref<64x4xf32, #tpu.memory_space<vmem>>, %arg5: memref<64x1xf32, #tpu.memory_space<vmem>>, %arg6: memref<1x64x256xf32, #tpu.memory_space<vmem>>) attributes {dimension_semantics = [#tpu.dimension_semantics<parallel>], iteration_bounds = array<i64: 2>, scalar_prefetch = 0 : i64, scratch_operands = 0 : i64, tpu.core_type = #tpu.core_type<tc>, window_params = [{transform_indices = @transform_0, window_bounds = array<i64: 1, 64, 256>}, {pipeline_mode = #tpu.pipeline_mode<synchronous>, transform_indices = @transform_1, window_bounds = array<i64: 4, 64>}, {pipeline_mode = #tpu.pipeline_mode<synchronous>, transform_indices = @transform_2, window_bounds = array<i64: 4, 1>}, {pipeline_mode = #tpu.pipeline_mode<synchronous>, transform_indices = @transform_3, window_bounds = array<i64: 64, 4>}, {pipeline_mode = #tpu.pipeline_mode<synchronous>, transform_indices = @transform_4, window_bounds = array<i64: 64, 1>}, {transform_indices = @transform_5, window_bounds = array<i64: 1, 64, 256>}]} {
    %c0 = arith.constant 0 : index
    %c0_0 = arith.constant 0 : index
    %c0_1 = arith.constant 0 : index
    %0 = vector.load %arg1[%c0, %c0_0, %c0_1] : memref<1x64x256xf32, #tpu.memory_space<vmem>>, vector<1x64x256xf32>
    %1 = vector.shape_cast %0 : vector<1x64x256xf32> to vector<64x256xf32>
    %cst = arith.constant dense<0.000000e+00> : vector<64xf32>
    %2 = vector.multi_reduction <add>, %1, %cst [1] : vector<64x256xf32> to vector<64xf32>
    %3 = vector.shape_cast %2 : vector<64xf32> to vector<64x1xf32>
    %cst_2 = arith.constant 3.906250e-03 : f32
    %4 = vector.broadcast %cst_2 : f32 to vector<64x1xf32>
    %5 = arith.mulf %3, %4 : vector<64x1xf32>
    %c0_3 = arith.constant 0 : index
    %c0_4 = arith.constant 0 : index
    %6 = vector.load %arg2[%c0_3, %c0_4] : memref<4x64xf32, #tpu.memory_space<vmem>>, vector<4x64xf32>
    %cst_5 = arith.constant dense<0.000000e+00> : vector<4x1xf32>
    %7 = tpu.matmul %6, %5, %cst_5 {dimension_numbers = #tpu.dot_dimension_numbers<[1], [0], [0], [1], [0, 0, 1, 1], [], []>} : vector<4x64xf32>, vector<64x1xf32>, vector<4x1xf32> -> vector<4x1xf32>
    %c0_6 = arith.constant 0 : index
    %c0_7 = arith.constant 0 : index
    %8 = vector.load %arg3[%c0_6, %c0_7] : memref<4x1xf32, #tpu.memory_space<vmem>>, vector<4x1xf32>
    %9 = arith.addf %7, %8 : vector<4x1xf32>
    %cst_8 = arith.constant 0.000000e+00 : f32
    %10 = vector.broadcast %cst_8 : f32 to vector<4x1xf32>
    %11 = arith.maximumf %9, %10 : vector<4x1xf32>
    %c0_9 = arith.constant 0 : index
    %c0_10 = arith.constant 0 : index
    %12 = vector.load %arg4[%c0_9, %c0_10] : memref<64x4xf32, #tpu.memory_space<vmem>>, vector<64x4xf32>
    %cst_11 = arith.constant dense<0.000000e+00> : vector<64x1xf32>
    %13 = tpu.matmul %12, %11, %cst_11 {dimension_numbers = #tpu.dot_dimension_numbers<[1], [0], [0], [1], [0, 0, 1, 1], [], []>} : vector<64x4xf32>, vector<4x1xf32>, vector<64x1xf32> -> vector<64x1xf32>
    %c0_12 = arith.constant 0 : index
    %c0_13 = arith.constant 0 : index
    %14 = vector.load %arg5[%c0_12, %c0_13] : memref<64x1xf32, #tpu.memory_space<vmem>>, vector<64x1xf32>
    %15 = arith.addf %13, %14 : vector<64x1xf32>
    %16 = arith.negf %15 : vector<64x1xf32>
    %17 = math.exp %16 : vector<64x1xf32>
    %cst_14 = arith.constant 1.000000e+00 : f32
    %18 = vector.broadcast %cst_14 : f32 to vector<64x1xf32>
    %19 = arith.addf %18, %17 : vector<64x1xf32>
    %20 = arith.divf %18, %19 : vector<64x1xf32>
    %21 = vector.broadcast %20 : vector<64x1xf32> to vector<64x256xf32>
    %22 = arith.mulf %1, %21 : vector<64x256xf32>
    %c0_15 = arith.constant 0 : index
    %c0_16 = arith.constant 0 : index
    %c0_17 = arith.constant 0 : index
    %23 = vector.load %arg6[%c0_15, %c0_16, %c0_17] : memref<1x64x256xf32, #tpu.memory_space<vmem>>, vector<1x64x256xf32>
    %24 = vector.shape_cast %23 : vector<1x64x256xf32> to vector<64x256xf32>
    %25 = vector.shape_cast %22 : vector<64x256xf32> to vector<1x64x256xf32>
    tpu.vector_store %arg6[%c0_15, %c0_16, %c0_17], %25 {strides = array<i32>} : memref<1x64x256xf32, #tpu.memory_space<vmem>>, vector<1x64x256xf32>,
    return
  }
  func.func @transform_0(%arg0: i32) -> (i32, i32, i32) {
    %c0_i32 = arith.constant 0 : i32
    %c0_i32_0 = arith.constant 0 : i32
    %c0_i32_1 = arith.constant 0 : i32
    return %arg0, %c0_i32, %c0_i32_0 : i32, i32, i32
  }
  func.func @transform_1(%arg0: i32) -> (i32, i32) {
    %c0_i32 = arith.constant 0 : i32
    %c0_i32_0 = arith.constant 0 : i32
    %c0_i32_1 = arith.constant 0 : i32
    return %c0_i32, %c0_i32_0 : i32, i32
  }
  func.func @transform_2(%arg0: i32) -> (i32, i32) {
    %c0_i32 = arith.constant 0 : i32
    %c0_i32_0 = arith.constant 0 : i32
    %c0_i32_1 = arith.constant 0 : i32
    return %c0_i32, %c0_i32_0 : i32, i32
  }
  func.func @transform_3(%arg0: i32) -> (i32, i32) {
    %c0_i32 = arith.constant 0 : i32
    %c0_i32_0 = arith.constant 0 : i32
    %c0_i32_1 = arith.constant 0 : i32
    return %c0_i32, %c0_i32_0 : i32, i32
  }
  func.func @transform_4(%arg0: i32) -> (i32, i32) {
    %c0_i32 = arith.constant 0 : i32
    %c0_i32_0 = arith.constant 0 : i32
    %c0_i32_1 = arith.constant 0 : i32
    return %c0_i32, %c0_i32_0 : i32, i32
  }
  func.func @transform_5(%arg0: i32) -> (i32, i32, i32) {
    %c0_i32 = arith.constant 0 : i32
    %c0_i32_0 = arith.constant 0 : i32
    %c0_i32_1 = arith.constant 0 : i32
    return %arg0, %c0_i32, %c0_i32_0 : i32, i32, i32
  }
}

</mosaic_0001>

<llo_original>
// kernel: tpu_custom_call.1
$region0: #{tpu_custom_call.1}
  #allocation0 [shape = 'u32[]', space=smem, size = 0x4, offset = 0x4, fixed_abs, tag = 'smem constant byte address 0x4 - core index']
  #allocation1 [shape = 'u32[144,128]{1,0:T(1,128)}', space=vmem, size = 0x12000, scoped, tag = 'internal scratch']
  %s0 = inlined_call_operand.hbm [shape: f32[2,64,256], index: 0, kind: input, shape index: {}]
  %s1 = inlined_call_operand.vmem [shape: f32[4,64], index: 1, kind: input, shape index: {}]
  %s2 = inlined_call_operand.vmem [shape: f32[4,1], index: 2, kind: input, shape index: {}]
  %s3 = inlined_call_operand.vmem [shape: f32[64,4], index: 3, kind: input, shape index: {}]
  %s4 = inlined_call_operand.vmem [shape: f32[64,1], index: 4, kind: input, shape index: {}]
  %s5 = inlined_call_operand.hbm [shape: f32[2,64,256], index: 5, kind: output, shape index: {}]
  %s6 = sld [smem:[#allocation0]]
  $region57: #{tpu_custom_call.1} parent=0
    _
  %s8 = ssub.s32 1, %s6
  %s9 = scalar_select 0, %s8, %s6
  $region1: #{tpu_custom_call.1} parent=0
    #allocation2 [shape = 'u8[131072]{0}', space=vmem, size = 0x20000, scoped, tag = 'input window, operand 0']
    #allocation3 [shape = 's32[2]{0}', space=sflag, size = 0x8, scoped, tag = 'scoped memory for tpu_custom_call.1']
    #allocation4 [shape = 's32[2]{0}', space=sflag, size = 0x8, scoped, tag = 'scoped memory for tpu_custom_call.1']
    #allocation5 [shape = 'u8[131072]{0}', space=vmem, size = 0x20000, scoped, tag = 'output window, operand 0']
    %10 = vsyncpa [#allocation3], 0
    %s11 = scalar_lea.sflag [#allocation3], 1
    %12 = vsyncpa %s11, 0
    %13 = vsyncpa [#allocation4], 0
    %s14 = scalar_lea.sflag [#allocation4], 1
    %15 = vsyncpa %s14, 0
    loop: start=0, step=1, limit=4
    $region2: #{tpu_custom_call.1} parent=1 // loop_pre_header
      _
    $region3: #{tpu_custom_call.1} parent=1 // loop_header
      %s17 = sphi 0, %s21
      %p18 = scmp.ge.s32.totalorder %s17, 4
      %s27 = sphi 0, %s29
      %s30 = sphi 0, %s27
      %s31 = sphi 0, %s30
      %s47 = sphi 0, %s31
      %s51 = sphi 0, %s51
      %s53 = sphi 0, %s51
      %s54 = sphi 0, %s53
      %s68 = sphi 0, %s54
      %s72 = sphi 0, %s72
      %s74 = sphi 0, %s72
      %s75 = sphi 0, %s74
      %s89 = sphi 0, %s75
      %s93 = sphi 0, %s93
      %s95 = sphi 0, %s93
      %s96 = sphi 0, %s95
      %s110 = sphi 0, %s96
      %s114 = sphi 0, %s114
      %s116 = sphi 0, %s114
      %s117 = sphi 0, %s116
      %s131 = sphi 0, %s117
      %s137 = sphi 0, %s139
      %s140 = sphi 0, %s137
      %s141 = sphi 0, %s140
      %s157 = sphi 0, %s141
    $region4: #{tpu_custom_call.1} parent=1 // loop_header_branch
      %20 = sbr.rel (%p18) target = $region8
    $region5: #{tpu_custom_call.1} parent=1 // loop_body
      %s22 = ssub.s32 %s17, 1
      %s23 = ssub.s32 %s17, 2
      %s24 = sadd.s32 %s17, 1
      %s25 = ssub.s32 %s17, %s24
      %p26 = scmp.eq.s32.totalorder %s25, 0
      %s28 = sadd.s32 %s27, 1
      %s29 = scalar_select %p26, %s27, %s28
      %p32 = pneg %p26
      %p33 = scmp.eq.s32.totalorder %s17, 1
      %p34 = por %p32, %p33
      %p35 = scmp.ne.s32.totalorder %s27, %s30
      %p36 = scmp.eq.s32.totalorder %s17, 0
      %p37 = por %p35, %p36
      %p38 = scmp.ne.s32.totalorder %s27, %s30
      %p39 = scmp.eq.s32.totalorder %s22, 1
      %p40 = por %p38, %p39
      %p41 = scmp.ne.s32.totalorder %s30, %s31
      %p42 = scmp.eq.s32.totalorder %s22, 0
      %p43 = por %p41, %p42
      %p44 = scmp.ne.s32.totalorder %s30, %s31
      %p45 = scmp.eq.s32.totalorder %s23, 1
      %p46 = por %p44, %p45
      %p48 = scmp.ne.s32.totalorder %s31, %s47
      %p49 = scmp.eq.s32.totalorder %s23, 0
      %p50 = por %p48, %p49
      %s52 = sadd.s32 %s51, 1
      %p55 = scmp.eq.s32.totalorder %s17, 1
      %p56 = scmp.ne.s32.totalorder %s51, %s53
      %p57 = scmp.eq.s32.totalorder %s17, 0
      %p58 = por %p56, %p57
      %p59 = scmp.ne.s32.totalorder %s51, %s53
      %p60 = scmp.eq.s32.totalorder %s22, 1
      %p61 = por %p59, %p60
      %p62 = scmp.ne.s32.totalorder %s53, %s54
      %p63 = scmp.eq.s32.totalorder %s22, 0
      %p64 = por %p62, %p63
      %p65 = scmp.ne.s32.totalorder %s53, %s54
      %p66 = scmp.eq.s32.totalorder %s23, 1
      %p67 = por %p65, %p66
      %p69 = scmp.ne.s32.totalorder %s54, %s68
      %p70 = scmp.eq.s32.totalorder %s23, 0
      %p71 = por %p69, %p70
      %s73 = sadd.s32 %s72, 1
      %p76 = scmp.eq.s32.totalorder %s17, 1
      %p77 = scmp.ne.s32.totalorder %s72, %s74
      %p78 = scmp.eq.s32.totalorder %s17, 0
      %p79 = por %p77, %p78
      %p80 = scmp.ne.s32.totalorder %s72, %s74
      %p81 = scmp.eq.s32.totalorder %s22, 1
      %p82 = por %p80, %p81
      %p83 = scmp.ne.s32.totalorder %s74, %s75
      %p84 = scmp.eq.s32.totalorder %s22, 0
      %p85 = por %p83, %p84
      %p86 = scmp.ne.s32.totalorder %s74, %s75
      %p87 = scmp.eq.s32.totalorder %s23, 1
      %p88 = por %p86, %p87
      %p90 = scmp.ne.s32.totalorder %s75, %s89
      %p91 = scmp.eq.s32.totalorder %s23, 0
      %p92 = por %p90, %p91
      %s94 = sadd.s32 %s93, 1
      %p97 = scmp.eq.s32.totalorder %s17, 1
      %p98 = scmp.ne.s32.totalorder %s93, %s95
      %p99 = scmp.eq.s32.totalorder %s17, 0
      %p100 = por %p98, %p99
      %p101 = scmp.ne.s32.totalorder %s93, %s95
      %p102 = scmp.eq.s32.totalorder %s22, 1
      %p103 = por %p101, %p102
      %p104 = scmp.ne.s32.totalorder %s95, %s96
      %p105 = scmp.eq.s32.totalorder %s22, 0
      %p106 = por %p104, %p105
      %p107 = scmp.ne.s32.totalorder %s95, %s96
      %p108 = scmp.eq.s32.totalorder %s23, 1
      %p109 = por %p107, %p108
      %p111 = scmp.ne.s32.totalorder %s96, %s110
      %p112 = scmp.eq.s32.totalorder %s23, 0
      %p113 = por %p111, %p112
      %s115 = sadd.s32 %s114, 1
      %p118 = scmp.eq.s32.totalorder %s17, 1
      %p119 = scmp.ne.s32.totalorder %s114, %s116
      %p120 = scmp.eq.s32.totalorder %s17, 0
      %p121 = por %p119, %p120
      %p122 = scmp.ne.s32.totalorder %s114, %s116
      %p123 = scmp.eq.s32.totalorder %s22, 1
      %p124 = por %p122, %p123
      %p125 = scmp.ne.s32.totalorder %s116, %s117
      %p126 = scmp.eq.s32.totalorder %s22, 0
      %p127 = por %p125, %p126
      %p128 = scmp.ne.s32.totalorder %s116, %s117
      %p129 = scmp.eq.s32.totalorder %s23, 1
      %p130 = por %p128, %p129
      %p132 = scmp.ne.s32.totalorder %s117, %s131
      %p133 = scmp.eq.s32.totalorder %s23, 0
      %p134 = por %p132, %p133
      %s135 = ssub.s32 %s17, %s24
      %p136 = scmp.eq.s32.totalorder %s135, 0
      %s138 = sadd.s32 %s137, 1
      %s139 = scalar_select %p136, %s137, %s138
      %p142 = pneg %p136
      %p143 = scmp.eq.s32.totalorder %s17, 1
      %p144 = por %p142, %p143
      %p145 = scmp.ne.s32.totalorder %s137, %s140
      %p146 = scmp.eq.s32.totalorder %s17, 0
      %p147 = por %p145, %p146
      %p148 = scmp.ne.s32.totalorder %s137, %s140
      %p149 = scmp.eq.s32.totalorder %s22, 1
      %p150 = por %p148, %p149
      %p151 = scmp.ne.s32.totalorder %s140, %s141
      %p152 = scmp.eq.s32.totalorder %s22, 0
      %p153 = por %p151, %p152
      %p154 = scmp.ne.s32.totalorder %s140, %s141
      %p155 = scmp.eq.s32.totalorder %s23, 1
      %p156 = por %p154, %p155
      %p158 = scmp.ne.s32.totalorder %s141, %s157
      %p159 = scmp.eq.s32.totalorder %s23, 0
      %p160 = por %p158, %p159
      %p161 = scmp.le.s32.totalorder 1, %s17
      %p162 = scmp.lt.s32.totalorder %s17, 3
      %p163 = pnand %p161, %p162
      %p164 = pneg %p163
      // Predicated region
      $region9: #{tpu_custom_call.1} parent=5 // pred_check
        _
      $region10: #{tpu_custom_call.1} parent=5 // pred_check_branch
        %166 = sbr.rel (%p163) target = $region12
      $region11: #{tpu_custom_call.1} parent=5 // pred_region
        %s167 = ssub.s32 %s17, 1
        // Predicated region
        $region13: #{tpu_custom_call.1} parent=11 // pred_check
          %p168 = pneg %p64
        $region14: #{tpu_custom_call.1} parent=11 // pred_check_branch
          %170 = sbr.rel (%p168) target = $region16
        $region15: #{tpu_custom_call.1} parent=11 // pred_region
          _
        $region16: #{tpu_custom_call.1} parent=11 // pred_fallthru
          _
        // Predicated region
        $region17: #{tpu_custom_call.1} parent=11 // pred_check
          %p171 = pneg %p85
        $region18: #{tpu_custom_call.1} parent=11 // pred_check_branch
          %173 = sbr.rel (%p171) target = $region20
        $region19: #{tpu_custom_call.1} parent=11 // pred_region
          _
        $region20: #{tpu_custom_call.1} parent=11 // pred_fallthru
          _
        // Predicated region
        $region21: #{tpu_custom_call.1} parent=11 // pred_check
          %p174 = pneg %p106
        $region22: #{tpu_custom_call.1} parent=11 // pred_check_branch
          %176 = sbr.rel (%p174) target = $region24
        $region23: #{tpu_custom_call.1} parent=11 // pred_region
          _
        $region24: #{tpu_custom_call.1} parent=11 // pred_fallthru
          _
        // Predicated region
        $region25: #{tpu_custom_call.1} parent=11 // pred_check
          %p177 = pneg %p127
        $region26: #{tpu_custom_call.1} parent=11 // pred_check_branch
          %179 = sbr.rel (%p177) target = $region28
        $region27: #{tpu_custom_call.1} parent=11 // pred_region
          _
        $region28: #{tpu_custom_call.1} parent=11 // pred_fallthru
          _
      $region12: #{tpu_custom_call.1} parent=5 // pred_fallthru
        _
      %p180 = scmp.lt.s32.totalorder %s17, 2
      // Predicated region
      $region29: #{tpu_custom_call.1} parent=5 // pred_check
        %p181 = pneg %p180
      $region30: #{tpu_custom_call.1} parent=5 // pred_check_branch
        %183 = sbr.rel (%p181) target = $region32
      $region31: #{tpu_custom_call.1} parent=5 // pred_region
        // Predicated region
        $region33: #{tpu_custom_call.1} parent=31 // pred_check
          %p184 = pneg %p37
        $region34: #{tpu_custom_call.1} parent=31 // pred_check_branch
          %186 = sbr.rel (%p184) target = $region36
        $region35: #{tpu_custom_call.1} parent=31 // pred_region
          %s187 = sand.u32 %s27, 1
          %s188 = scalar_lea.sflag [#allocation3], %s187
          %s189 = sand.u32 %s27, 1
          %s190 = smul.addr %s189, 128
          %s191 = scalar_lea.vmem [#allocation2], %s190
          %s193 = ssub.s32 2048, 2048
          %194 = vsyncadd %s188, %s193
          %s195 = smul.addr %s17, 16
          %s196 = smul.addr %s195, 128
          %s197 = scalar_lea.hbm %s0, %s196
          %s198 = sshll.u32 %s191, 4
          %s199 = int_to_ptr.vmem [resolvable:$true] %s198
          %204 = dma.hbm_to_vmem [thread:$0]  %s197, 2048, %s199, %s188, 256, 256, 16
        $region36: #{tpu_custom_call.1} parent=31 // pred_fallthru
          _
      $region32: #{tpu_custom_call.1} parent=5 // pred_fallthru
        _
      %p205 = scmp.le.s32.totalorder 1, %s17
      %p206 = scmp.lt.s32.totalorder %s17, 3
      %p207 = pnand %p205, %p206
      %p208 = pneg %p207
      // Predicated region
      $region37: #{tpu_custom_call.1} parent=5 // pred_check
        _
      $region38: #{tpu_custom_call.1} parent=5 // pred_check_branch
        %210 = sbr.rel (%p207) target = $region40
      $region39: #{tpu_custom_call.1} parent=5 // pred_region
        %s211 = ssub.s32 %s17, 1
        %s212 = sand.u32 %s30, 1
        %s213 = scalar_lea.sflag [#allocation3], %s212
        %s214 = sand.u32 %s30, 1
        %s215 = smul.addr %s214, 128
        %s216 = scalar_lea.vmem [#allocation2], %s215
        // Predicated region
        $region41: #{tpu_custom_call.1} parent=39 // pred_check
          %p217 = pneg %p43
        $region42: #{tpu_custom_call.1} parent=39 // pred_check_branch
          %219 = sbr.rel (%p217) target = $region44
        $region43: #{tpu_custom_call.1} parent=39 // pred_region
          %220 = dma.done %s213, 2048
        $region44: #{tpu_custom_call.1} parent=39 // pred_fallthru
          _
        %s221 = sand.u32 %s30, 1
        %s222 = scalar_lea.sflag [#allocation3], %s221
        %s223 = sand.u32 %s30, 1
        %s224 = smul.addr %s223, 128
        %s225 = scalar_lea.vmem [#allocation2], %s224
        %p226 = pneg %p43
        %p227 = pneg %p40
        %p228 = pneg %p64
        %p229 = pneg %p61
        %p230 = pneg %p85
        %p231 = pneg %p82
        %p232 = pneg %p106
        %p233 = pneg %p103
        %p234 = pneg %p127
        %p235 = pneg %p124
        %p236 = pneg %p153
        %p237 = pneg %p150
        %s238 = sand.u32 %s140, 1
        %s239 = scalar_lea.sflag [#allocation4], %s238
        %s240 = sand.u32 %s140, 1
        %s241 = smul.addr %s240, 128
        %s242 = scalar_lea.vmem [#allocation5], %s241
        %v243 = vld [vmem:[%s216] sm:$0xff]
        %v244 = vld [vmem:[%s216 + $0x8] sm:$0xff]
        %v245 = vld [vmem:[%s216 + $0x10] sm:$0xff]
        %v246 = vld [vmem:[%s216 + $0x18] sm:$0xff]
        %v247 = vld [vmem:[%s216 + $0x20] sm:$0xff]
        %v248 = vld [vmem:[%s216 + $0x28] sm:$0xff]
        %v249 = vld [vmem:[%s216 + $0x30] sm:$0xff]
        %v250 = vld [vmem:[%s216 + $0x38] sm:$0xff]
        %v251 = vld [vmem:[%s216 + $0x40] sm:$0xff]
        %v252 = vld [vmem:[%s216 + $0x48] sm:$0xff]
        %v253 = vld [vmem:[%s216 + $0x50] sm:$0xff]
        %v254 = vld [vmem:[%s216 + $0x58] sm:$0xff]
        %v255 = vld [vmem:[%s216 + $0x60] sm:$0xff]
        %v256 = vld [vmem:[%s216 + $0x68] sm:$0xff]
        %v257 = vld [vmem:[%s216 + $0x70] sm:$0xff]
        %v258 = vld [vmem:[%s216 + $0x78] sm:$0xff]
        %v259 = vadd.f32 %v243, %v244
        %260 = vadd.xlane.f32.xlu0 %v259
        %v261 = vpop.xlane.xlu0 %260
        %v262 = vadd.f32 %v245, %v246
        %263 = vadd.xlane.f32.xlu0 %v262
        %v264 = vpop.xlane.xlu0 %263
        %v265 = vadd.f32 %v247, %v248
        %266 = vadd.xlane.f32.xlu0 %v265
        %v267 = vpop.xlane.xlu0 %266
        %v268 = vadd.f32 %v249, %v250
        %269 = vadd.xlane.f32.xlu0 %v268
        %v270 = vpop.xlane.xlu0 %269
        %v271 = vadd.f32 %v251, %v252
        %272 = vadd.xlane.f32.xlu0 %v271
        %v273 = vpop.xlane.xlu0 %272
        %v274 = vadd.f32 %v253, %v254
        %275 = vadd.xlane.f32.xlu0 %v274
        %v276 = vpop.xlane.xlu0 %275
        %v277 = vadd.f32 %v255, %v256
        %278 = vadd.xlane.f32.xlu0 %v277
        %v279 = vpop.xlane.xlu0 %278
        %v280 = vadd.f32 %v257, %v258
        %281 = vadd.xlane.f32.xlu0 %v280
        %v282 = vpop.xlane.xlu0 %281
        %v283 = vmul.f32 %v261, 0.00390625
        %v284 = vmul.f32 %v264, 0.00390625
        %v285 = vmul.f32 %v267, 0.00390625
        %v286 = vmul.f32 %v270, 0.00390625
        %v287 = vmul.f32 %v273, 0.00390625
        %v288 = vmul.f32 %v276, 0.00390625
        %v289 = vmul.f32 %v279, 0.00390625
        %v290 = vmul.f32 %v282, 0.00390625
        %v291 = vld [vmem:[%s1] sm:$0xf]
        %v292 = vld [vmem:[%s2] sm:$0xf]
        %vm293 = vcmask 523264
        %v295 = vsel %vm293, %v291, 0
        %297 = vmatprep.subr.mxu0 0.0
        %298 = vmatpush1.msra.mxu0 %v283
        %299 = vmatprep.subr.mxu0 0.0
        %300 = vmatpush1.msra.mxu0 %v284
        %301 = vmatprep.subr.mxu0 0.0
        %302 = vmatpush1.msra.mxu0 %v285
        %303 = vmatprep.subr.mxu0 0.0
        %304 = vmatpush1.msra.mxu0 %v286
        %305 = vmatprep.subr.mxu0 0.0
        %306 = vmatpush1.msra.mxu0 %v287
        %307 = vmatprep.subr.mxu0 0.0
        %308 = vmatpush1.msra.mxu0 %v288
        %309 = vmatprep.subr.mxu0 0.0
        %310 = vmatpush1.msra.mxu0 %v289
        %311 = vmatprep.subr.mxu0 0.0
        %312 = vmatpush1.msra.mxu0 %v290
        %313 = vmatprep.subr.mxu0 0.0
        %314 = vmatpush1.msra.mxu0 0.0
        %315 = vmatprep.subr.mxu0 0.0
        %316 = vmatpush1.msra.mxu0 0.0
        %317 = vmatprep.subr.mxu0 0.0
        %318 = vmatpush1.msra.mxu0 0.0
        %319 = vmatprep.subr.mxu0 0.0
        %320 = vmatpush1.msra.mxu0 0.0
        %321 = vmatprep.subr.mxu0 0.0
        %322 = vmatpush1.msra.mxu0 0.0
        %323 = vmatprep.subr.mxu0 0.0
        %324 = vmatpush1.msra.mxu0 0.0
        %325 = vmatprep.subr.mxu0 0.0
        %326 = vmatpush1.msra.mxu0 0.0
        %327 = vmatprep.subr.mxu0 0.0
        %328 = vmatpush1.msra.mxu0 0.0
        %329 = vmatprep.subr.mxu0 0.0
        %330 = vmatpush1.msra.mxu0 0.0
        %331 = vmatprep.subr.mxu0 0.0
        %332 = vmatpush1.msra.mxu0 0.0
        %333 = vmatprep.subr.mxu0 0.0
        %334 = vmatpush1.msra.mxu0 0.0
        %335 = vmatprep.subr.mxu0 0.0
        %336 = vmatpush1.msra.mxu0 0.0
        %337 = vmatprep.subr.mxu0 0.0
        %338 = vmatpush1.msra.mxu0 0.0
        %339 = vmatprep.subr.mxu0 0.0
        %340 = vmatpush1.msra.mxu0 0.0
        %341 = vmatprep.subr.mxu0 0.0
        %342 = vmatpush1.msra.mxu0 0.0
        %343 = vmatprep.subr.mxu0 0.0
        %344 = vmatpush1.msra.mxu0 0.0
        %345 = vmatprep.subr.mxu0 0.0
        %346 = vmatpush1.msra.mxu0 0.0
        %347 = vmatprep.subr.mxu0 0.0
        %348 = vmatpush1.msra.mxu0 0.0
        %349 = vmatprep.subr.mxu0 0.0
        %350 = vmatpush1.msra.mxu0 0.0
        %351 = vmatprep.subr.mxu0 0.0
        %352 = vmatpush1.msra.mxu0 0.0
        %353 = vmatprep.subr.mxu0 0.0
        %354 = vmatpush1.msra.mxu0 0.0
        %355 = vmatprep.subr.mxu0 0.0
        %356 = vmatpush1.msra.mxu0 0.0
        %357 = vmatprep.subr.mxu0 0.0
        %358 = vmatpush1.msra.mxu0 0.0
        %359 = vmatprep.subr.mxu0 0.0
        %360 = vmatpush1.msra.mxu0 0.0
        %361 = vmatprep.mubr.f32.mxu0 0.0
        %362 = vmatmul.mubr.f32.gmra.mrb[0].mxu0 %v295
        %v363 = vpop.f32.mrb[0].mxu0
        %v364 = vadd.f32 %v292, %v363
        %v365 = vpop.f32.mrb[0].mxu0
        %366 = vdwg.mxu0
        %v367 = vmax.f32 %v364, 0.0
        %v368 = vld [vmem:[%s3] sm:$0xff]
        %v369 = vld [vmem:[%s3 + $0x8] sm:$0xff]
        %v370 = vld [vmem:[%s3 + $0x10] sm:$0xff]
        %v371 = vld [vmem:[%s3 + $0x18] sm:$0xff]
        %v372 = vld [vmem:[%s3 + $0x20] sm:$0xff]
        %v373 = vld [vmem:[%s3 + $0x28] sm:$0xff]
        %v374 = vld [vmem:[%s3 + $0x30] sm:$0xff]
        %v375 = vld [vmem:[%s3 + $0x38] sm:$0xff]
        %v376 = vld [vmem:[%s4] sm:$0xff]
        %v377 = vld [vmem:[%s4 + $0x8] sm:$0xff]
        %v378 = vld [vmem:[%s4 + $0x10] sm:$0xff]
        %v379 = vld [vmem:[%s4 + $0x18] sm:$0xff]
        %v380 = vld [vmem:[%s4 + $0x20] sm:$0xff]
        %v381 = vld [vmem:[%s4 + $0x28] sm:$0xff]
        %v382 = vld [vmem:[%s4 + $0x30] sm:$0xff]
        %v383 = vld [vmem:[%s4 + $0x38] sm:$0xff]
        %vm384 = vcmask 31744
        %v386 = vsel %vm384, %v368, 0
        %v389 = vsel %vm384, %v369, 0
        %v392 = vsel %vm384, %v370, 0
        %v395 = vsel %vm384, %v371, 0
        %v398 = vsel %vm384, %v372, 0
        %v401 = vsel %vm384, %v373, 0
        %v404 = vsel %vm384, %v374, 0
        %v407 = vsel %vm384, %v375, 0
        %vm409 = vcmask 1043456
        %v411 = vsel %vm409, %v367, 0
        %413 = vmatprep.subr.mxu0 0.0
        %414 = vmatpush1.msra.mxu0 %v411
        %415 = vmatprep.subr.mxu0 0.0
        %416 = vmatpush1.msra.mxu0 0.0
        %417 = vmatprep.subr.mxu0 0.0
        %418 = vmatpush1.msra.mxu0 0.0
        %419 = vmatprep.subr.mxu0 0.0
        %420 = vmatpush1.msra.mxu0 0.0
        %421 = vmatprep.subr.mxu0 0.0
        %422 = vmatpush1.msra.mxu0 0.0
        %423 = vmatprep.subr.mxu0 0.0
        %424 = vmatpush1.msra.mxu0 0.0
        %425 = vmatprep.subr.mxu0 0.0
        %426 = vmatpush1.msra.mxu0 0.0
        %427 = vmatprep.subr.mxu0 0.0
        %428 = vmatpush1.msra.mxu0 0.0
        %429 = vmatprep.subr.mxu0 0.0
        %430 = vmatpush1.msra.mxu0 0.0
        %431 = vmatprep.subr.mxu0 0.0
        %432 = vmatpush1.msra.mxu0 0.0
        %433 = vmatprep.subr.mxu0 0.0
        %434 = vmatpush1.msra.mxu0 0.0
        %435 = vmatprep.subr.mxu0 0.0
        %436 = vmatpush1.msra.mxu0 0.0
        %437 = vmatprep.subr.mxu0 0.0
        %438 = vmatpush1.msra.mxu0 0.0
        %439 = vmatprep.subr.mxu0 0.0
        %440 = vmatpush1.msra.mxu0 0.0
        %441 = vmatprep.subr.mxu0 0.0
        %442 = vmatpush1.msra.mxu0 0.0
        %443 = vmatprep.subr.mxu0 0.0
        %444 = vmatpush1.msra.mxu0 0.0
        %445 = vmatprep.subr.mxu0 0.0
        %446 = vmatpush1.msra.mxu0 0.0
        %447 = vmatprep.subr.mxu0 0.0
        %448 = vmatpush1.msra.mxu0 0.0
        %449 = vmatprep.subr.mxu0 0.0
        %450 = vmatpush1.msra.mxu0 0.0
        %451 = vmatprep.subr.mxu0 0.0
        %452 = vmatpush1.msra.mxu0 0.0
        %453 = vmatprep.subr.mxu0 0.0
        %454 = vmatpush1.msra.mxu0 0.0
        %455 = vmatprep.subr.mxu0 0.0
        %456 = vmatpush1.msra.mxu0 0.0
        %457 = vmatprep.subr.mxu0 0.0
        %458 = vmatpush1.msra.mxu0 0.0
        %459 = vmatprep.subr.mxu0 0.0
        %460 = vmatpush1.msra.mxu0 0.0
        %461 = vmatprep.subr.mxu0 0.0
        %462 = vmatpush1.msra.mxu0 0.0
        %463 = vmatprep.subr.mxu0 0.0
        %464 = vmatpush1.msra.mxu0 0.0
        %465 = vmatprep.subr.mxu0 0.0
        %466 = vmatpush1.msra.mxu0 0.0
        %467 = vmatprep.subr.mxu0 0.0
        %468 = vmatpush1.msra.mxu0 0.0
        %469 = vmatprep.subr.mxu0 0.0
        %470 = vmatpush1.msra.mxu0 0.0
        %471 = vmatprep.subr.mxu0 0.0
        %472 = vmatpush1.msra.mxu0 0.0
        %473 = vmatprep.subr.mxu0 0.0
        %474 = vmatpush1.msra.mxu0 0.0
        %475 = vmatprep.subr.mxu0 0.0
        %476 = vmatpush1.msra.mxu0 0.0
        %477 = vmatprep.mubr.f32.mxu0 0.0
        %478 = vmatmul.mubr.f32.gmra.mrb[0].mxu0 %v386
        %v479 = vpop.f32.mrb[0].mxu0
        %v480 = vadd.f32 %v376, %v479
        %v481 = vpop.f32.mrb[0].mxu0
        %482 = vmatprep.mubr.f32.mxu0 0.0
        %483 = vmatmul.mubr.f32.gmra.mrb[0].mxu0 %v389
        %v484 = vpop.f32.mrb[0].mxu0
        %v485 = vadd.f32 %v377, %v484
        %v486 = vpop.f32.mrb[0].mxu0
        %487 = vmatprep.mubr.f32.mxu0 0.0
        %488 = vmatmul.mubr.f32.gmra.mrb[0].mxu0 %v392
        %v489 = vpop.f32.mrb[0].mxu0
        %v490 = vadd.f32 %v378, %v489
        %v491 = vpop.f32.mrb[0].mxu0
        %492 = vmatprep.mubr.f32.mxu0 0.0
        %493 = vmatmul.mubr.f32.gmra.mrb[0].mxu0 %v395
        %v494 = vpop.f32.mrb[0].mxu0
        %v495 = vadd.f32 %v379, %v494
        %v496 = vpop.f32.mrb[0].mxu0
        %497 = vmatprep.mubr.f32.mxu0 0.0
        %498 = vmatmul.mubr.f32.gmra.mrb[0].mxu0 %v398
        %v499 = vpop.f32.mrb[0].mxu0
        %v500 = vadd.f32 %v380, %v499
        %v501 = vpop.f32.mrb[0].mxu0
        %502 = vmatprep.mubr.f32.mxu0 0.0
        %503 = vmatmul.mubr.f32.gmra.mrb[0].mxu0 %v401
        %v504 = vpop.f32.mrb[0].mxu0
        %v505 = vadd.f32 %v381, %v504
        %v506 = vpop.f32.mrb[0].mxu0
        %507 = vmatprep.mubr.f32.mxu0 0.0
        %508 = vmatmul.mubr.f32.gmra.mrb[0].mxu0 %v404
        %v509 = vpop.f32.mrb[0].mxu0
        %v510 = vadd.f32 %v382, %v509
        %v511 = vpop.f32.mrb[0].mxu0
        %512 = vmatprep.mubr.f32.mxu0 0.0
        %513 = vmatmul.mubr.f32.gmra.mrb[0].mxu0 %v407
        %v514 = vpop.f32.mrb[0].mxu0
        %v515 = vadd.f32 %v383, %v514
        %v516 = vpop.f32.mrb[0].mxu0
        %517 = vdwg.mxu0
        %v518 = vxor.u32 %v480, 2147483648
        %v519 = vxor.u32 %v485, 2147483648
        %v520 = vxor.u32 %v490, 2147483648
        %v521 = vxor.u32 %v495, 2147483648
        %v522 = vxor.u32 %v500, 2147483648
        %v523 = vxor.u32 %v505, 2147483648
        %v524 = vxor.u32 %v510, 2147483648
        %v525 = vxor.u32 %v515, 2147483648
        %v526 = vmul.f32 %v518, 1.442695
        %v527 = vpow.pop %v526
        %v528 = vmul.f32 %v519, 1.442695
        %v529 = vpow.pop %v528
        %v530 = vmul.f32 %v520, 1.442695
        %v531 = vpow.pop %v530
        %v532 = vmul.f32 %v521, 1.442695
        %v533 = vpow.pop %v532
        %v534 = vmul.f32 %v522, 1.442695
        %v535 = vpow.pop %v534
        %v536 = vmul.f32 %v523, 1.442695
        %v537 = vpow.pop %v536
        %v538 = vmul.f32 %v524, 1.442695
        %v539 = vpow.pop %v538
        %v540 = vmul.f32 %v525, 1.442695
        %v541 = vpow.pop %v540
        %v542 = vadd.f32 %v527, 1.0
        %v543 = vadd.f32 %v529, 1.0
        %v544 = vadd.f32 %v531, 1.0
        %v545 = vadd.f32 %v533, 1.0
        %v546 = vadd.f32 %v535, 1.0
        %v547 = vadd.f32 %v537, 1.0
        %v548 = vadd.f32 %v539, 1.0
        %v549 = vadd.f32 %v541, 1.0
        %v550 = vrcp.pop %v542
        %v551 = vmul.f32 1.0, %v550
        %v552 = vrcp.pop %v543
        %v553 = vmul.f32 1.0, %v552
        %v554 = vrcp.pop %v544
        %v555 = vmul.f32 1.0, %v554
        %v556 = vrcp.pop %v545
        %v557 = vmul.f32 1.0, %v556
        %v558 = vrcp.pop %v546
        %v559 = vmul.f32 1.0, %v558
        %v560 = vrcp.pop %v547
        %v561 = vmul.f32 1.0, %v560
        %v562 = vrcp.pop %v548
        %v563 = vmul.f32 1.0, %v562
        %v564 = vrcp.pop %v549
        %v565 = vmul.f32 1.0, %v564
        %567 = vset.pattern.permute.xlu0 0
        %568 = vperm.xlu0 %567, %v551
        %v569 = vpop.permute.xlu0 %568
        %572 = vset.pattern.permute.xlu0 0
        %573 = vperm.xlu0 %572, %v553
        %v574 = vpop.permute.xlu0 %573
        %577 = vset.pattern.permute.xlu0 0
        %578 = vperm.xlu0 %577, %v555
        %v579 = vpop.permute.xlu0 %578
        %582 = vset.pattern.permute.xlu0 0
        %583 = vperm.xlu0 %582, %v557
        %v584 = vpop.permute.xlu0 %583
        %587 = vset.pattern.permute.xlu0 0
        %588 = vperm.xlu0 %587, %v559
        %v589 = vpop.permute.xlu0 %588
        %592 = vset.pattern.permute.xlu0 0
        %593 = vperm.xlu0 %592, %v561
        %v594 = vpop.permute.xlu0 %593
        %597 = vset.pattern.permute.xlu0 0
        %598 = vperm.xlu0 %597, %v563
        %v599 = vpop.permute.xlu0 %598
        %602 = vset.pattern.permute.xlu0 0
        %603 = vperm.xlu0 %602, %v565
        %v604 = vpop.permute.xlu0 %603
        %v606 = vmul.f32 %v243, %v569
        %v607 = vmul.f32 %v244, %v569
        %v608 = vmul.f32 %v245, %v574
        %v609 = vmul.f32 %v246, %v574
        %v610 = vmul.f32 %v247, %v579
        %v611 = vmul.f32 %v248, %v579
        %v612 = vmul.f32 %v249, %v584
        %v613 = vmul.f32 %v250, %v584
        %v614 = vmul.f32 %v251, %v589
        %v615 = vmul.f32 %v252, %v589
        %v616 = vmul.f32 %v253, %v594
        %v617 = vmul.f32 %v254, %v594
        %v618 = vmul.f32 %v255, %v599
        %v619 = vmul.f32 %v256, %v599
        %v620 = vmul.f32 %v257, %v604
        %v621 = vmul.f32 %v258, %v604
        %622 = vst [vmem:[%s242] sm:$0xff] %v606
        %623 = vst [vmem:[%s242 + $0x8] sm:$0xff] %v607
        %624 = vst [vmem:[%s242 + $0x10] sm:$0xff] %v608
        %625 = vst [vmem:[%s242 + $0x18] sm:$0xff] %v609
        %626 = vst [vmem:[%s242 + $0x20] sm:$0xff] %v610
        %627 = vst [vmem:[%s242 + $0x28] sm:$0xff] %v611
        %628 = vst [vmem:[%s242 + $0x30] sm:$0xff] %v612
        %629 = vst [vmem:[%s242 + $0x38] sm:$0xff] %v613
        %630 = vst [vmem:[%s242 + $0x40] sm:$0xff] %v614
        %631 = vst [vmem:[%s242 + $0x48] sm:$0xff] %v615
        %632 = vst [vmem:[%s242 + $0x50] sm:$0xff] %v616
        %633 = vst [vmem:[%s242 + $0x58] sm:$0xff] %v617
        %634 = vst [vmem:[%s242 + $0x60] sm:$0xff] %v618
        %635 = vst [vmem:[%s242 + $0x68] sm:$0xff] %v619
        %636 = vst [vmem:[%s242 + $0x70] sm:$0xff] %v620
        %637 = vst [vmem:[%s242 + $0x78] sm:$0xff] %v621
        %s638 = sand.u32 %s140, 1
        %s639 = scalar_lea.sflag [#allocation4], %s638
        %s640 = sand.u32 %s140, 1
        %s641 = smul.addr %s640, 128
        %s642 = scalar_lea.vmem [#allocation5], %s641
        // Predicated region
        $region45: #{tpu_custom_call.1} parent=39 // pred_check
          %p643 = pneg %p150
        $region46: #{tpu_custom_call.1} parent=39 // pred_check_branch
          %645 = sbr.rel (%p643) target = $region48
        $region47: #{tpu_custom_call.1} parent=39 // pred_region
          %s647 = ssub.s32 2048, 2048
          %648 = vsyncadd %s639, %s647
          %s649 = smul.addr %s22, 16
          %s650 = smul.addr %s649, 128
          %s651 = scalar_lea.hbm %s5, %s650
          %s652 = sshll.u32 %s642, 4
          %s653 = int_to_ptr.vmem [resolvable:$true] %s652
          %658 = dma.vmem_to_hbm [thread:$0]  %s653, 2048, %s651, %s639, 256, 256, 16
        $region48: #{tpu_custom_call.1} parent=39 // pred_fallthru
          _
      $region40: #{tpu_custom_call.1} parent=5 // pred_fallthru
        _
      %p659 = scmp.le.s32.totalorder 2, %s17
      // Predicated region
      $region49: #{tpu_custom_call.1} parent=5 // pred_check
        %p660 = pneg %p659
      $region50: #{tpu_custom_call.1} parent=5 // pred_check_branch
        %662 = sbr.rel (%p660) target = $region52
      $region51: #{tpu_custom_call.1} parent=5 // pred_region
        %s663 = ssub.s32 %s17, 2
        // Predicated region
        $region53: #{tpu_custom_call.1} parent=51 // pred_check
          %p664 = pneg %p156
        $region54: #{tpu_custom_call.1} parent=51 // pred_check_branch
          %666 = sbr.rel (%p664) target = $region56
        $region55: #{tpu_custom_call.1} parent=51 // pred_region
          %s667 = sand.u32 %s141, 1
          %s668 = scalar_lea.sflag [#allocation4], %s667
          %s669 = sand.u32 %s141, 1
          %s670 = smul.addr %s669, 128
          %s671 = scalar_lea.vmem [#allocation5], %s670
          %672 = dma.done %s668, 2048
        $region56: #{tpu_custom_call.1} parent=51 // pred_fallthru
          _
      $region52: #{tpu_custom_call.1} parent=5 // pred_fallthru
        _
    $region6: #{tpu_custom_call.1} parent=1 // loop_footer
      %s21 = sadd.s32 1, %s17
    $region7: #{tpu_custom_call.1} parent=1 // loop_footer_branch
      %16 = sbr.rel target = $region3
    $region8: #{tpu_custom_call.1} parent=1 // loop_exit
      _
    %673 = vsyncpa [#allocation3], 1
    %s674 = scalar_lea.sflag [#allocation3], 1
    %675 = vsyncpa %s674, 1
    %676 = vsyncpa [#allocation4], 1
    %s677 = scalar_lea.sflag [#allocation4], 1
    %678 = vsyncpa %s677, 1

</llo_original>
